<compile_context>
chip_gen: v6e
topology: v6e:2x2x1
jax: 0.10.0
libtpu: 0.0.40
codegen_flags: <defaults>
</compile_context>

<pallas_src>
import functools
import math

import jax
import jax.numpy as jnp
from jax import lax
from jax.experimental import pallas as pl
from jax.experimental.pallas import tpu as pltpu

LANE = 128
NEG_SLOPE = 0.01  # PyTorch F.leaky_relu default

fc1_units = 256
fc2_units = 128


def _round_up(x, m):
    return ((x + m - 1) // m) * m


def actor_kernel(x_ref, w1_ref, b1_ref, w2_ref, b2_ref, w3_ref, b3_ref, out_ref,
                 *, sub, n_sub):
    """Fused 3-layer MLP over one (TB, S) batch tile.

    The tile is processed in `sub`-row chunks so per-chunk activations stay
    small (vreg / top-of-VMEM resident) instead of round-tripping (TB, 256)
    f32 intermediates through VMEM.  Weights/biases are loaded once per tile.
    """
    w1 = w1_ref[...]
    b1 = b1_ref[...]
    w2 = w2_ref[...]
    b2 = b2_ref[...]
    w3 = w3_ref[...]
    b3 = b3_ref[...]

    def body(s, carry):
        off = pl.multiple_of(s * sub, sub)
        x = x_ref[pl.ds(off, sub), :]
        if x.dtype != jnp.bfloat16:          # trace-time branch; no-op for bf16 input
            x = x.astype(jnp.bfloat16)

        # fc1 (bf16 operands on the MXU, f32 accumulate / elementwise)
        h1 = jnp.dot(x, w1, preferred_element_type=jnp.float32) + b1
        h1 = jnp.maximum(h1, NEG_SLOPE * h1)

        # fc2
        h2 = jnp.dot(h1.astype(jnp.bfloat16), w2,
                     preferred_element_type=jnp.float32) + b2
        h2 = jnp.maximum(h2, NEG_SLOPE * h2)

        # fc3 (output lane-padded to 128 -> dense stores), tanh, bf16 store
        h3 = jnp.dot(h2.astype(jnp.bfloat16), w3,
                     preferred_element_type=jnp.float32) + b3
        out_ref[pl.ds(off, sub), :] = jnp.tanh(h3).astype(out_ref.dtype)
        return carry

    lax.fori_loop(0, n_sub, body, 0, unroll=(n_sub <= 8))


def prepare_params(params_f32):
    """Convert f32 (in, out)-layout params into kernel params:
    bf16 weights, f32 biases, fc3 zero-padded on the output axis to 128 lanes."""
    w1, b1, w2, b2, w3, b3 = params_f32
    n = w3.shape[1]
    n_pad = max(LANE, _round_up(n, LANE))
    w3p = jnp.zeros((w3.shape[0], n_pad), jnp.float32).at[:, :n].set(w3)
    b3p = jnp.zeros((1, n_pad), jnp.float32).at[:, :n].set(b3)
    return (w1.astype(jnp.bfloat16), b1,
            w2.astype(jnp.bfloat16), b2,
            w3p.astype(jnp.bfloat16), b3p)


def actor_forward(state, kernel_params, *, tile_b=1024):
    """Run the fused Actor MLP.

    `state` is (B, S), ideally bf16 straight from the producer.  Returns the
    lane-padded (Bp, 128) bf16 output slab (Bp = n_tiles * TB; first B rows and
    first `action_size` lanes are valid).  The caller should index the slab
    directly (`out[:B, :action_size]`) so the slice fuses into the consumer
    instead of forcing a separate HBM pass here.
    """
    w1, b1, w2, b2, w3p, b3p = kernel_params
    B, S = state.shape
    H1 = w1.shape[1]
    H2 = w2.shape[1]
    Np = w3p.shape[1]

    # Batch tile: multiple of 8 sublanes, up to tile_b rows per grid step.
    b8 = _round_up(B, 8)
    TB = min(tile_b, b8)
    if b8 <= TB and B > 128:
        # Whole batch would fit one tile: split into >=2 tiles so the
        # "parallel" grid axis gives the second TensorCore (v7x) work.
        TB = _round_up(-(-b8 // 2), 8)
    n_tiles = -(-B // TB)      # cdiv; last block may be partial (no jnp.pad HBM pass)
    Bp = n_tiles * TB

    # Sub-chunk rows per inner-loop step: largest of 64/32/16/8 dividing TB.
    for cand in (64, 32, 16, 8):
        if TB % cand == 0:
            SUB = cand
            break
    n_sub = TB // SUB

    bytes_w = ((w1.size + w2.size + w3p.size) * 2
               + (b1.size + b2.size + b3p.size) * 4)
    cost = pl.CostEstimate(
        flops=2 * Bp * (S * H1 + H1 * H2 + H2 * Np),
        transcendentals=Bp * Np,  # tanh
        bytes_accessed=(state.size * state.dtype.itemsize
                        + bytes_w
                        + Bp * Np * 2),
    )

    # Rough per-call VMEM working set: double-buffered I/O tiles + resident
    # weights + per-chunk f32 intermediates; 2x margin, 8 MiB floor.
    vmem_bytes = (2 * (TB * S * state.dtype.itemsize + TB * Np * 2)
                  + bytes_w + SUB * (H1 + H2) * 4)
    vmem_limit = int(min(64 << 20, max(8 << 20, 2 * vmem_bytes)))

    # Weights/biases are tiny: keep them as full resident blocks every grid step.
    full = lambda a: pl.BlockSpec(a.shape, lambda i: (0,) * a.ndim)

    out = pl.pallas_call(
        functools.partial(actor_kernel, sub=SUB, n_sub=n_sub),
        out_shape=jax.ShapeDtypeStruct((Bp, Np), jnp.bfloat16),
        grid=(n_tiles,),
        in_specs=[
            pl.BlockSpec((TB, S), lambda i: (i, 0)),   # state tiled on batch
            full(w1), full(b1), full(w2), full(b2), full(w3p), full(b3p),
        ],
        out_specs=pl.BlockSpec((TB, Np), lambda i: (i, 0)),
        compiler_params=pltpu.CompilerParams(
            dimension_semantics=("parallel",),   # megacore / 2nd TC on v7x
            vmem_limit_bytes=vmem_limit,
        ),
        cost_estimate=cost,
    )(state, w1, b1, w2, b2, w3p, b3p)
    return out


def init_actor_params(key, state_size, action_size, fc1_u=256, fc2_u=128):
    """Deterministic init mirroring the PyTorch module's shapes.
    Mimics Actor.reset_parameters(): weight ~ U(-lim, lim) with lim = 1/sqrt(out_features)
    (that is what `layer.weight.data.size()[0]` gives in the reference code).
    Biases use PyTorch's default nn.Linear init: U(-1/sqrt(fan_in), 1/sqrt(fan_in))."""
    ks = jax.random.split(key, 6)

    def layer(kw, kb, fan_in, fan_out):
        w_lim = 1.0 / math.sqrt(fan_out)   # reference uses weight.size()[0] = out_features
        b_lim = 1.0 / math.sqrt(fan_in)    # PyTorch default bias init
        w = jax.random.uniform(kw, (fan_in, fan_out), jnp.float32, -w_lim, w_lim)
        b = jax.random.uniform(kb, (1, fan_out), jnp.float32, -b_lim, b_lim)
        return w, b

    w1, b1 = layer(ks[0], ks[1], state_size, fc1_u)
    w2, b2 = layer(ks[2], ks[3], fc1_u, fc2_u)
    w3, b3 = layer(ks[4], ks[5], fc2_u, action_size)
    return (w1, b1, w2, b2, w3, b3)


if __name__ == "__main__":
    key = jax.random.PRNGKey(0)
    k_state, k_params = jax.random.split(key)

    batch = 16
    state_size = 32
    action_size = 4

    params_f32 = init_actor_params(k_params, state_size, action_size, fc1_units, fc2_units)
    kernel_params = prepare_params(params_f32)

    # Producer emits bf16 directly (halves the per-row input DMA bytes).
    state = jax.random.normal(k_state, (batch, state_size), dtype=jnp.bfloat16)

    out_slab = actor_forward(state, kernel_params)
    out_slab = jax.block_until_ready(out_slab)

    # Consumer-side indexing of the padded slab (in a real pipeline this slice
    # fuses into the consumer; done here only to validate against the reference).
    out = out_slab[:batch, :action_size].astype(jnp.float32)

    # Reference check in plain JAX (full f32) on the same bf16 inputs the kernel saw.
    # Tolerance accounts for bf16 matmul operands and the bf16 output store.
    w1, b1, w2, b2, w3, b3 = params_f32
    x = state.astype(jnp.float32)
    h1 = jax.nn.leaky_relu(x @ w1 + b1, negative_slope=NEG_SLOPE)
    h2 = jax.nn.leaky_relu(h1 @ w2 + b2, negative_slope=NEG_SLOPE)
    ref = jnp.tanh(h2 @ w3 + b3)

    assert out.shape == (batch, action_size)
    max_err = jnp.max(jnp.abs(out - ref))
    assert jnp.allclose(out, ref, atol=3e-2, rtol=3e-2), f"max abs err = {max_err}"

    print("KERNEL_OK")
</pallas_src>

<mosaic_0001>
module attributes {stable_mosaic.version = 11 : i64} {
  func.func @actor_kernel(%arg0: i32, %arg1: memref<16x32xbf16, #tpu.memory_space<vmem>>, %arg2: memref<32x256xbf16, #tpu.memory_space<vmem>>, %arg3: memref<1x256xf32, #tpu.memory_space<vmem>>, %arg4: memref<256x128xbf16, #tpu.memory_space<vmem>>, %arg5: memref<1x128xf32, #tpu.memory_space<vmem>>, %arg6: memref<128x128xbf16, #tpu.memory_space<vmem>>, %arg7: memref<1x128xf32, #tpu.memory_space<vmem>>, %arg8: memref<16x128xbf16, #tpu.memory_space<vmem>>) attributes {dimension_semantics = [#tpu.dimension_semantics<parallel>], iteration_bounds = array<i64: 1>, scalar_prefetch = 0 : i64, scratch_operands = 0 : i64, tpu.core_type = #tpu.core_type<tc>, window_params = [{transform_indices = @transform_0, window_bounds = array<i64: 16, 32>}, {pipeline_mode = #tpu.pipeline_mode<synchronous>, transform_indices = @transform_1, window_bounds = array<i64: 32, 256>}, {pipeline_mode = #tpu.pipeline_mode<synchronous>, transform_indices = @transform_2, window_bounds = array<i64: 1, 256>}, {pipeline_mode = #tpu.pipeline_mode<synchronous>, transform_indices = @transform_3, window_bounds = array<i64: 256, 128>}, {pipeline_mode = #tpu.pipeline_mode<synchronous>, transform_indices = @transform_4, window_bounds = array<i64: 1, 128>}, {pipeline_mode = #tpu.pipeline_mode<synchronous>, transform_indices = @transform_5, window_bounds = array<i64: 128, 128>}, {pipeline_mode = #tpu.pipeline_mode<synchronous>, transform_indices = @transform_6, window_bounds = array<i64: 1, 128>}, {transform_indices = @transform_7, window_bounds = array<i64: 16, 128>}]} {
    %c0 = arith.constant 0 : index
    %c0_0 = arith.constant 0 : index
    %0 = vector.load %arg2[%c0, %c0_0] : memref<32x256xbf16, #tpu.memory_space<vmem>>, vector<32x256xbf16>
    %c0_1 = arith.constant 0 : index
    %c0_2 = arith.constant 0 : index
    %1 = vector.load %arg3[%c0_1, %c0_2] : memref<1x256xf32, #tpu.memory_space<vmem>>, vector<1x256xf32>
    %c0_3 = arith.constant 0 : index
    %c0_4 = arith.constant 0 : index
    %2 = vector.load %arg4[%c0_3, %c0_4] : memref<256x128xbf16, #tpu.memory_space<vmem>>, vector<256x128xbf16>
    %c0_5 = arith.constant 0 : index
    %c0_6 = arith.constant 0 : index
    %3 = vector.load %arg5[%c0_5, %c0_6] : memref<1x128xf32, #tpu.memory_space<vmem>>, vector<1x128xf32>
    %c0_7 = arith.constant 0 : index
    %c0_8 = arith.constant 0 : index
    %4 = vector.load %arg6[%c0_7, %c0_8] : memref<128x128xbf16, #tpu.memory_space<vmem>>, vector<128x128xbf16>
    %c0_9 = arith.constant 0 : index
    %c0_10 = arith.constant 0 : index
    %5 = vector.load %arg7[%c0_9, %c0_10] : memref<1x128xf32, #tpu.memory_space<vmem>>, vector<1x128xf32>
    %c0_i32 = arith.constant 0 : i32
    %c16_i32 = arith.constant 16 : i32
    %6 = arith.muli %c0_i32, %c16_i32 : i32
    %7 = tpu.assume_multiple %6, 16 : i32
    %8 = arith.index_cast %7 : i32 to index
    %c0_11 = arith.constant 0 : index
    %9 = vector.load %arg1[%8, %c0_11] : memref<16x32xbf16, #tpu.memory_space<vmem>>, vector<16x32xbf16>
    %cst = arith.constant dense<0.000000e+00> : vector<16x256xf32>
    %10 = tpu.matmul %9, %0, %cst {dimension_numbers = #tpu.dot_dimension_numbers<[1], [0], [0], [1], [0, 0, 1, 1], [], []>} : vector<16x32xbf16>, vector<32x256xbf16>, vector<16x256xf32> -> vector<16x256xf32>
    %11 = vector.broadcast %1 : vector<1x256xf32> to vector<16x256xf32>
    %12 = arith.addf %10, %11 : vector<16x256xf32>
    %cst_12 = arith.constant 0.00999999977 : f32
    %13 = vector.broadcast %cst_12 : f32 to vector<16x256xf32>
    %14 = arith.mulf %13, %12 : vector<16x256xf32>
    %15 = arith.maximumf %12, %14 : vector<16x256xf32>
    %16 = arith.truncf %15 : vector<16x256xf32> to vector<16x256xbf16>
    %cst_13 = arith.constant dense<0.000000e+00> : vector<16x128xf32>
    %17 = tpu.matmul %16, %2, %cst_13 {dimension_numbers = #tpu.dot_dimension_numbers<[1], [0], [0], [1], [0, 0, 1, 1], [], []>} : vector<16x256xbf16>, vector<256x128xbf16>, vector<16x128xf32> -> vector<16x128xf32>
    %18 = vector.broadcast %3 : vector<1x128xf32> to vector<16x128xf32>
    %19 = arith.addf %17, %18 : vector<16x128xf32>
    %cst_14 = arith.constant 0.00999999977 : f32
    %20 = vector.broadcast %cst_14 : f32 to vector<16x128xf32>
    %21 = arith.mulf %20, %19 : vector<16x128xf32>
    %22 = arith.maximumf %19, %21 : vector<16x128xf32>
    %23 = arith.truncf %22 : vector<16x128xf32> to vector<16x128xbf16>
    %cst_15 = arith.constant dense<0.000000e+00> : vector<16x128xf32>
    %24 = tpu.matmul %23, %4, %cst_15 {dimension_numbers = #tpu.dot_dimension_numbers<[1], [0], [0], [1], [0, 0, 1, 1], [], []>} : vector<16x128xbf16>, vector<128x128xbf16>, vector<16x128xf32> -> vector<16x128xf32>
    %25 = vector.broadcast %5 : vector<1x128xf32> to vector<16x128xf32>
    %26 = arith.addf %24, %25 : vector<16x128xf32>
    %27 = math.tanh %26 : vector<16x128xf32>
    %28 = arith.truncf %27 : vector<16x128xf32> to vector<16x128xbf16>
    %29 = arith.index_cast %7 : i32 to index
    %c0_16 = arith.constant 0 : index
    %30 = vector.load %arg8[%29, %c0_16] : memref<16x128xbf16, #tpu.memory_space<vmem>>, vector<16x128xbf16>
    tpu.vector_store %arg8[%29, %c0_16], %28 {strides = array<i32>} : memref<16x128xbf16, #tpu.memory_space<vmem>>, vector<16x128xbf16>,
    %c1_i32 = arith.constant 1 : i32
    return
  }
  func.func @transform_0(%arg0: i32) -> (i32, i32) {
    %c0_i32 = arith.constant 0 : i32
    %c0_i32_0 = arith.constant 0 : i32
    return %arg0, %c0_i32 : i32, i32
  }
  func.func @transform_1(%arg0: i32) -> (i32, i32) {
    %c0_i32 = arith.constant 0 : i32
    %c0_i32_0 = arith.constant 0 : i32
    %c0_i32_1 = arith.constant 0 : i32
    return %c0_i32, %c0_i32_0 : i32, i32
  }
  func.func @transform_2(%arg0: i32) -> (i32, i32) {
    %c0_i32 = arith.constant 0 : i32
    %c0_i32_0 = arith.constant 0 : i32
    %c0_i32_1 = arith.constant 0 : i32
    return %c0_i32, %c0_i32_0 : i32, i32
  }
  func.func @transform_3(%arg0: i32) -> (i32, i32) {
    %c0_i32 = arith.constant 0 : i32
    %c0_i32_0 = arith.constant 0 : i32
    %c0_i32_1 = arith.constant 0 : i32
    return %c0_i32, %c0_i32_0 : i32, i32
  }
  func.func @transform_4(%arg0: i32) -> (i32, i32) {
    %c0_i32 = arith.constant 0 : i32
    %c0_i32_0 = arith.constant 0 : i32
    %c0_i32_1 = arith.constant 0 : i32
    return %c0_i32, %c0_i32_0 : i32, i32
  }
  func.func @transform_5(%arg0: i32) -> (i32, i32) {
    %c0_i32 = arith.constant 0 : i32
    %c0_i32_0 = arith.constant 0 : i32
    %c0_i32_1 = arith.constant 0 : i32
    return %c0_i32, %c0_i32_0 : i32, i32
  }
  func.func @transform_6(%arg0: i32) -> (i32, i32) {
    %c0_i32 = arith.constant 0 : i32
    %c0_i32_0 = arith.constant 0 : i32
    %c0_i32_1 = arith.constant 0 : i32
    return %c0_i32, %c0_i32_0 : i32, i32
  }
  func.func @transform_7(%arg0: i32) -> (i32, i32) {
    %c0_i32 = arith.constant 0 : i32
    %c0_i32_0 = arith.constant 0 : i32
    return %arg0, %c0_i32 : i32, i32
  }
}

</mosaic_0001>

<llo_original>
// kernel: tpu_custom_call.1
$region0: #{tpu_custom_call.1}
  #allocation0 [shape = 'u32[]', space=smem, size = 0x4, offset = 0x4, fixed_abs, tag = 'smem constant byte address 0x4 - core index']
  #allocation1 [shape = 'u32[144,128]{1,0:T(1,128)}', space=vmem, size = 0x12000, scoped, tag = 'internal scratch']
  %s0 = inlined_call_operand.hbm [shape: bf16[16,32], index: 0, kind: input, shape index: {}]
  %s1 = inlined_call_operand.hbm [shape: bf16[32,256], index: 1, kind: input, shape index: {}]
  %s2 = inlined_call_operand.vmem [shape: f32[1,256], index: 2, kind: input, shape index: {}]
  %s3 = inlined_call_operand.hbm [shape: bf16[256,128], index: 3, kind: input, shape index: {}]
  %s4 = inlined_call_operand.vmem [shape: f32[1,128], index: 4, kind: input, shape index: {}]
  %s5 = inlined_call_operand.hbm [shape: bf16[128,128], index: 5, kind: input, shape index: {}]
  %s6 = inlined_call_operand.vmem [shape: f32[1,128], index: 6, kind: input, shape index: {}]
  %s7 = inlined_call_operand.hbm [shape: bf16[16,128], index: 7, kind: output, shape index: {}]
  %s8 = sld [smem:[#allocation0]]
  $region54: #{tpu_custom_call.1} parent=0
    _
  %s10 = ssub.s32 1, %s8
  %s11 = scalar_select 0, %s10, %s8
  $region1: #{tpu_custom_call.1} parent=0
    #allocation2 [shape = 'u8[4096]{0}', space=vmem, size = 0x1000, scoped, tag = 'input window, operand 0, single buffered']
    #allocation3 [shape = 's32[1]{0}', space=sflag, size = 0x4, scoped, tag = 'scoped memory for tpu_custom_call.1']
    #allocation4 [shape = 's32[1]{0}', space=sflag, size = 0x4, scoped, tag = 'scoped memory for tpu_custom_call.1']
    #allocation5 [shape = 'u8[16384]{0}', space=vmem, size = 0x4000, scoped, tag = 'input window, operand 1, single buffered']
    #allocation6 [shape = 's32[1]{0}', space=sflag, size = 0x4, scoped, tag = 'scoped memory for tpu_custom_call.1']
    #allocation7 [shape = 'u8[65536]{0}', space=vmem, size = 0x10000, scoped, tag = 'input window, operand 3, single buffered']
    #allocation8 [shape = 'u8[32768]{0}', space=vmem, size = 0x8000, scoped, tag = 'input window, operand 5, single buffered']
    #allocation9 [shape = 's32[1]{0}', space=sflag, size = 0x4, scoped, tag = 'scoped memory for tpu_custom_call.1']
    #allocation10 [shape = 'u8[4096]{0}', space=vmem, size = 0x1000, scoped, tag = 'output window, operand 0, single buffered']
    %12 = vsyncpa [#allocation3], 0
    %13 = vsyncpa [#allocation6], 0
    %14 = vsyncpa [#allocation9], 0
    %15 = vsyncpa [#allocation4], 0
    // Predicated region
    $region2: #{tpu_custom_call.1} parent=1 // pred_check
      _
    $region3: #{tpu_custom_call.1} parent=1 // pred_check_branch
      %17 = sbr.rel (0) target = $region5
    $region4: #{tpu_custom_call.1} parent=1 // pred_region
      %s19 = ssub.s32 128, 128
      %20 = vsyncadd [#allocation3], %s19
      %s21 = sshll.u32 [#allocation2], 4
      %s22 = int_to_ptr.vmem [resolvable:$true] %s21
      %27 = dma.hbm_to_vmem [thread:$0]  %s0, 128, %s22, [#allocation3], 64, 64, 4
    $region5: #{tpu_custom_call.1} parent=1 // pred_fallthru
      _
    // Predicated region
    $region6: #{tpu_custom_call.1} parent=1 // pred_check
      _
    $region7: #{tpu_custom_call.1} parent=1 // pred_check_branch
      %29 = sbr.rel (0) target = $region9
    $region8: #{tpu_custom_call.1} parent=1 // pred_region
      %s31 = ssub.s32 512, 512
      %32 = vsyncadd [#allocation6], %s31
      %s33 = sshll.u32 [#allocation5], 4
      %s34 = int_to_ptr.vmem [resolvable:$true] %s33
      %39 = dma.hbm_to_vmem [thread:$0]  %s1, 512, %s34, [#allocation6], 128, 128, 8
    $region9: #{tpu_custom_call.1} parent=1 // pred_fallthru
      _
    // Predicated region
    $region10: #{tpu_custom_call.1} parent=1 // pred_check
      _
    $region11: #{tpu_custom_call.1} parent=1 // pred_check_branch
      %41 = sbr.rel (0) target = $region13
    $region12: #{tpu_custom_call.1} parent=1 // pred_region
      _
    $region13: #{tpu_custom_call.1} parent=1 // pred_fallthru
      _
    // Predicated region
    $region14: #{tpu_custom_call.1} parent=1 // pred_check
      _
    $region15: #{tpu_custom_call.1} parent=1 // pred_check_branch
      %43 = sbr.rel (0) target = $region17
    $region16: #{tpu_custom_call.1} parent=1 // pred_region
      %s45 = ssub.s32 2048, 2048
      %46 = vsyncadd [#allocation6], %s45
      %s47 = sshll.u32 [#allocation7], 4
      %s48 = int_to_ptr.vmem [resolvable:$true] %s47
      %53 = dma.hbm_to_vmem [thread:$0]  %s3, 2048, %s48, [#allocation6], 64, 64, 4
    $region17: #{tpu_custom_call.1} parent=1 // pred_fallthru
      _
    // Predicated region
    $region18: #{tpu_custom_call.1} parent=1 // pred_check
      _
    $region19: #{tpu_custom_call.1} parent=1 // pred_check_branch
      %55 = sbr.rel (0) target = $region21
    $region20: #{tpu_custom_call.1} parent=1 // pred_region
      _
    $region21: #{tpu_custom_call.1} parent=1 // pred_fallthru
      _
    // Predicated region
    $region22: #{tpu_custom_call.1} parent=1 // pred_check
      _
    $region23: #{tpu_custom_call.1} parent=1 // pred_check_branch
      %57 = sbr.rel (0) target = $region25
    $region24: #{tpu_custom_call.1} parent=1 // pred_region
      %s59 = ssub.s32 1024, 1024
      %60 = vsyncadd [#allocation9], %s59
      %s61 = sshll.u32 [#allocation8], 4
      %s62 = int_to_ptr.vmem [resolvable:$true] %s61
      %67 = dma.hbm_to_vmem [thread:$0]  %s5, 1024, %s62, [#allocation9], 64, 64, 4
    $region25: #{tpu_custom_call.1} parent=1 // pred_fallthru
      _
    // Predicated region
    $region26: #{tpu_custom_call.1} parent=1 // pred_check
      _
    $region27: #{tpu_custom_call.1} parent=1 // pred_check_branch
      %69 = sbr.rel (0) target = $region29
    $region28: #{tpu_custom_call.1} parent=1 // pred_region
      _
    $region29: #{tpu_custom_call.1} parent=1 // pred_fallthru
      _
    // Predicated region
    $region30: #{tpu_custom_call.1} parent=1 // pred_check
      _
    $region31: #{tpu_custom_call.1} parent=1 // pred_check_branch
      %71 = sbr.rel (0) target = $region33
    $region32: #{tpu_custom_call.1} parent=1 // pred_region
      %72 = dma.done [#allocation3], 128
    $region33: #{tpu_custom_call.1} parent=1 // pred_fallthru
      _
    // Predicated region
    $region34: #{tpu_custom_call.1} parent=1 // pred_check
      _
    $region35: #{tpu_custom_call.1} parent=1 // pred_check_branch
      %74 = sbr.rel (0) target = $region37
    $region36: #{tpu_custom_call.1} parent=1 // pred_region
      %75 = dma.done [#allocation6], 512
    $region37: #{tpu_custom_call.1} parent=1 // pred_fallthru
      _
    // Predicated region
    $region38: #{tpu_custom_call.1} parent=1 // pred_check
      _
    $region39: #{tpu_custom_call.1} parent=1 // pred_check_branch
      %77 = sbr.rel (0) target = $region41
    $region40: #{tpu_custom_call.1} parent=1 // pred_region
      %78 = dma.done [#allocation6], 2048
    $region41: #{tpu_custom_call.1} parent=1 // pred_fallthru
      _
    // Predicated region
    $region42: #{tpu_custom_call.1} parent=1 // pred_check
      _
    $region43: #{tpu_custom_call.1} parent=1 // pred_check_branch
      %80 = sbr.rel (0) target = $region45
    $region44: #{tpu_custom_call.1} parent=1 // pred_region
      %81 = dma.done [#allocation9], 1024
    $region45: #{tpu_custom_call.1} parent=1 // pred_fallthru
      _
    %v83 = vld [vmem:[#allocation5] sm:$0xff]
    %v84 = vld [vmem:[#allocation5 + $0x8] sm:$0xff]
    %v85 = vld [vmem:[#allocation5 + $0x10] sm:$0xff]
    %v86 = vld [vmem:[#allocation5 + $0x18] sm:$0xff]
    %v87 = vld [vmem:[%s2] sm:$0x3]
    %v88 = vld [vmem:[#allocation7] sm:$0xf]
    %v89 = vld [vmem:[#allocation7 + $0x4] sm:$0xf]
    %v90 = vld [vmem:[#allocation7 + $0x8] sm:$0xf]
    %v91 = vld [vmem:[#allocation7 + $0xc] sm:$0xf]
    %v92 = vld [vmem:[#allocation7 + $0x10] sm:$0xf]
    %v93 = vld [vmem:[#allocation7 + $0x14] sm:$0xf]
    %v94 = vld [vmem:[#allocation7 + $0x18] sm:$0xf]
    %v95 = vld [vmem:[#allocation7 + $0x1c] sm:$0xf]
    %v96 = vld [vmem:[#allocation7 + $0x20] sm:$0xf]
    %v97 = vld [vmem:[#allocation7 + $0x24] sm:$0xf]
    %v98 = vld [vmem:[#allocation7 + $0x28] sm:$0xf]
    %v99 = vld [vmem:[#allocation7 + $0x2c] sm:$0xf]
    %v100 = vld [vmem:[#allocation7 + $0x30] sm:$0xf]
    %v101 = vld [vmem:[#allocation7 + $0x34] sm:$0xf]
    %v102 = vld [vmem:[#allocation7 + $0x38] sm:$0xf]
    %v103 = vld [vmem:[#allocation7 + $0x3c] sm:$0xf]
    %v104 = vld [vmem:[#allocation7 + $0x40] sm:$0xf]
    %v105 = vld [vmem:[#allocation7 + $0x44] sm:$0xf]
    %v106 = vld [vmem:[#allocation7 + $0x48] sm:$0xf]
    %v107 = vld [vmem:[#allocation7 + $0x4c] sm:$0xf]
    %v108 = vld [vmem:[#allocation7 + $0x50] sm:$0xf]
    %v109 = vld [vmem:[#allocation7 + $0x54] sm:$0xf]
    %v110 = vld [vmem:[#allocation7 + $0x58] sm:$0xf]
    %v111 = vld [vmem:[#allocation7 + $0x5c] sm:$0xf]
    %v112 = vld [vmem:[#allocation7 + $0x60] sm:$0xf]
    %v113 = vld [vmem:[#allocation7 + $0x64] sm:$0xf]
    %v114 = vld [vmem:[#allocation7 + $0x68] sm:$0xf]
    %v115 = vld [vmem:[#allocation7 + $0x6c] sm:$0xf]
    %v116 = vld [vmem:[#allocation7 + $0x70] sm:$0xf]
    %v117 = vld [vmem:[#allocation7 + $0x74] sm:$0xf]
    %v118 = vld [vmem:[#allocation7 + $0x78] sm:$0xf]
    %v119 = vld [vmem:[#allocation7 + $0x7c] sm:$0xf]
    %v120 = vld [vmem:[%s4] sm:$0x1]
    %v121 = vld [vmem:[#allocation8] sm:$0xf]
    %v122 = vld [vmem:[#allocation8 + $0x4] sm:$0xf]
    %v123 = vld [vmem:[#allocation8 + $0x8] sm:$0xf]
    %v124 = vld [vmem:[#allocation8 + $0xc] sm:$0xf]
    %v125 = vld [vmem:[#allocation8 + $0x10] sm:$0xf]
    %v126 = vld [vmem:[#allocation8 + $0x14] sm:$0xf]
    %v127 = vld [vmem:[#allocation8 + $0x18] sm:$0xf]
    %v128 = vld [vmem:[#allocation8 + $0x1c] sm:$0xf]
    %v129 = vld [vmem:[#allocation8 + $0x20] sm:$0xf]
    %v130 = vld [vmem:[#allocation8 + $0x24] sm:$0xf]
    %v131 = vld [vmem:[#allocation8 + $0x28] sm:$0xf]
    %v132 = vld [vmem:[#allocation8 + $0x2c] sm:$0xf]
    %v133 = vld [vmem:[#allocation8 + $0x30] sm:$0xf]
    %v134 = vld [vmem:[#allocation8 + $0x34] sm:$0xf]
    %v135 = vld [vmem:[#allocation8 + $0x38] sm:$0xf]
    %v136 = vld [vmem:[#allocation8 + $0x3c] sm:$0xf]
    %v137 = vld [vmem:[%s6] sm:$0x1]
    %v138 = vld [vmem:[#allocation2] sm:$0xf]
    %v139 = vld [vmem:[#allocation2 + $0x4] sm:$0xf]
    %v141 = vlaneseq
    %v142 = vshrl.u32 %v141, 7
    %v143 = vsub.s32 0, %v142
    %v144 = vrot.slane %v87, %v143
    %v145 = vlaneseq
    %v146 = vshrl.u32 %v145, 7
    %v147 = vsub.s32 1, %v146
    %v148 = vrot.slane %v87, %v147
    %v153 = vunpack.c.l.b16 %v138
    %v154 = vunpack.c.l.b16 %v139
    %v155 = vpack.c.b16 %v154, %v153
    %v160 = vunpack.c.l.b16 %v83
    %v161 = vunpack.c.h.b16 %v83
    %v162 = vunpack.c.l.b16 %v84
    %v163 = vunpack.c.h.b16 %v84
    %v164 = vunpack.c.l.b16 %v85
    %v165 = vunpack.c.h.b16 %v85
    %v166 = vunpack.c.l.b16 %v86
    %v167 = vunpack.c.h.b16 %v86
    %v168 = vpack.c.b16 %v162, %v160
    %v169 = vpack.c.b16 %v163, %v161
    %v170 = vpack.c.b16 %v166, %v164
    %v171 = vpack.c.b16 %v167, %v165
    %vm176 = vcmask 261120
    %v178 = vsel %vm176, %v155, 0
    %180 = vmatprep.subr.bf16.mxu0 0
    %181 = vmatpush1.bf16.msra.mxu0 0
    %182 = vmatprep.subr.bf16.mxu0 0
    %183 = vmatpush1.bf16.msra.mxu0 0
    %184 = vmatprep.subr.bf16.mxu0 0
    %185 = vmatpush1.bf16.msra.mxu0 0
    %186 = vmatprep.subr.bf16.mxu0 0
    %187 = vmatpush1.bf16.msra.mxu0 0
    %188 = vmatprep.subr.bf16.mxu0 0
    %189 = vmatpush1.bf16.msra.mxu0 0
    %190 = vmatprep.subr.bf16.mxu0 0
    %191 = vmatpush1.bf16.msra.mxu0 0
    %192 = vmatprep.subr.bf16.mxu0 %v171
    %193 = vmatpush1.bf16.msra.mxu0 %v170
    %194 = vmatprep.subr.bf16.mxu0 %v169
    %195 = vmatpush1.bf16.msra.mxu0 %v168
    %196 = vmatprep.subr.bf16.mxu0 0
    %197 = vmatpush2.bf16.msra.mxu0 0
    %198 = vmatprep.subr.bf16.mxu0 0
    %199 = vmatpush2.bf16.msra.mxu0 0
    %200 = vmatprep.subr.bf16.mxu0 0
    %201 = vmatpush2.bf16.msra.mxu0 0
    %202 = vmatprep.subr.bf16.mxu0 0
    %203 = vmatpush2.bf16.msra.mxu0 0
    %204 = vmatprep.subr.bf16.mxu0 0
    %205 = vmatpush2.bf16.msra.mxu0 0
    %206 = vmatprep.subr.bf16.mxu0 0
    %207 = vmatpush2.bf16.msra.mxu0 0
    %208 = vmatprep.subr.bf16.mxu0 0
    %209 = vmatpush2.bf16.msra.mxu0 0
    %210 = vmatprep.subr.bf16.mxu0 0
    %211 = vmatpush2.bf16.msra.mxu0 0
    %212 = vmatprep.mubr.bf16.mxu0 0
    %213 = vmatmul.mubr.bf16.gmra.mxu0 %v178
    %v214 = vpop.f32.mrf.mxu0
    %v215 = vadd.f32 %v144, %v214
    %v216 = vpop.f32.mrf.mxu0
    %v217 = vadd.f32 %v148, %v216
    %v218 = vpop.f32.mrf.mxu0
    %v219 = vadd.f32 %v144, %v218
    %v220 = vpop.f32.mrf.mxu0
    %v221 = vadd.f32 %v148, %v220
    %222 = vdwg.mxu0
    %v223 = vmul.f32 %v215, 0.01
    %v224 = vmul.f32 %v217, 0.01
    %v225 = vmul.f32 %v219, 0.01
    %v226 = vmul.f32 %v221, 0.01
    %v227 = vmax.f32 %v215, %v223
    %v228 = vmax.f32 %v217, %v224
    %v229 = vmax.f32 %v219, %v225
    %v230 = vmax.f32 %v221, %v226
    %v231 = vpack.c.bf16 %v229, %v227
    %v232 = vpack.c.bf16 %v230, %v228
    %v234 = vlaneseq
    %v235 = vshrl.u32 %v234, 7
    %v236 = vsub.s32 0, %v235
    %v237 = vrot.slane %v120, %v236
    %v271 = vunpack.c.l.b16 %v88
    %v272 = vunpack.c.l.b16 %v89
    %v273 = vunpack.c.l.b16 %v90
    %v274 = vunpack.c.l.b16 %v91
    %v275 = vunpack.c.l.b16 %v92
    %v276 = vunpack.c.l.b16 %v93
    %v277 = vunpack.c.l.b16 %v94
    %v278 = vunpack.c.l.b16 %v95
    %v279 = vunpack.c.l.b16 %v96
    %v280 = vunpack.c.l.b16 %v97
    %v281 = vunpack.c.l.b16 %v98
    %v282 = vunpack.c.l.b16 %v99
    %v283 = vunpack.c.l.b16 %v100
    %v284 = vunpack.c.l.b16 %v101
    %v285 = vunpack.c.l.b16 %v102
    %v286 = vunpack.c.l.b16 %v103
    %v287 = vunpack.c.l.b16 %v104
    %v288 = vunpack.c.l.b16 %v105
    %v289 = vunpack.c.l.b16 %v106
    %v290 = vunpack.c.l.b16 %v107
    %v291 = vunpack.c.l.b16 %v108
    %v292 = vunpack.c.l.b16 %v109
    %v293 = vunpack.c.l.b16 %v110
    %v294 = vunpack.c.l.b16 %v111
    %v295 = vunpack.c.l.b16 %v112
    %v296 = vunpack.c.l.b16 %v113
    %v297 = vunpack.c.l.b16 %v114
    %v298 = vunpack.c.l.b16 %v115
    %v299 = vunpack.c.l.b16 %v116
    %v300 = vunpack.c.l.b16 %v117
    %v301 = vunpack.c.l.b16 %v118
    %v302 = vunpack.c.l.b16 %v119
    %v303 = vpack.c.b16 %v272, %v271
    %v304 = vpack.c.b16 %v274, %v273
    %v305 = vpack.c.b16 %v276, %v275
    %v306 = vpack.c.b16 %v278, %v277
    %v307 = vpack.c.b16 %v280, %v279
    %v308 = vpack.c.b16 %v282, %v281
    %v309 = vpack.c.b16 %v284, %v283
    %v310 = vpack.c.b16 %v286, %v285
    %v311 = vpack.c.b16 %v288, %v287
    %v312 = vpack.c.b16 %v290, %v289
    %v313 = vpack.c.b16 %v292, %v291
    %v314 = vpack.c.b16 %v294, %v293
    %v315 = vpack.c.b16 %v296, %v295
    %v316 = vpack.c.b16 %v298, %v297
    %v317 = vpack.c.b16 %v300, %v299
    %v318 = vpack.c.b16 %v302, %v301
    %335 = vmatprep.subr.bf16.mxu0 0
    %336 = vmatpush1.bf16.msra.mxu0 %v310
    %337 = vmatprep.subr.bf16.mxu0 0
    %338 = vmatpush1.bf16.msra.mxu0 %v309
    %339 = vmatprep.subr.bf16.mxu0 0
    %340 = vmatpush1.bf16.msra.mxu0 %v308
    %341 = vmatprep.subr.bf16.mxu0 0
    %342 = vmatpush1.bf16.msra.mxu0 %v307
    %343 = vmatprep.subr.bf16.mxu0 0
    %344 = vmatpush1.bf16.msra.mxu0 %v306
    %345 = vmatprep.subr.bf16.mxu0 0
    %346 = vmatpush1.bf16.msra.mxu0 %v305
    %347 = vmatprep.subr.bf16.mxu0 0
    %348 = vmatpush1.bf16.msra.mxu0 %v304
    %349 = vmatprep.subr.bf16.mxu0 0
    %350 = vmatpush1.bf16.msra.mxu0 %v303
    %351 = vmatprep.subr.bf16.mxu0 0
    %352 = vmatpush2.bf16.msra.mxu0 %v318
    %353 = vmatprep.subr.bf16.mxu0 0
    %354 = vmatpush2.bf16.msra.mxu0 %v317
    %355 = vmatprep.subr.bf16.mxu0 0
    %356 = vmatpush2.bf16.msra.mxu0 %v316
    %357 = vmatprep.subr.bf16.mxu0 0
    %358 = vmatpush2.bf16.msra.mxu0 %v315
    %359 = vmatprep.subr.bf16.mxu0 0
    %360 = vmatpush2.bf16.msra.mxu0 %v314
    %361 = vmatprep.subr.bf16.mxu0 0
    %362 = vmatpush2.bf16.msra.mxu0 %v313
    %363 = vmatprep.subr.bf16.mxu0 0
    %364 = vmatpush2.bf16.msra.mxu0 %v312
    %365 = vmatprep.subr.bf16.mxu0 0
    %366 = vmatpush2.bf16.msra.mxu0 %v311
    %367 = vmatprep.mubr.bf16.mxu0 %v232
    %368 = vmatmul.mubr.bf16.gmra.mxu0 %v231
    %v369 = vpop.f32.mrf.mxu0
    %v370 = vadd.f32 %v237, %v369
    %v371 = vpop.f32.mrf.mxu0
    %v372 = vpop.f32.mrf.mxu0
    %v373 = vadd.f32 %v237, %v372
    %v374 = vpop.f32.mrf.mxu0
    %375 = vdwg.mxu0
    %v376 = vmul.f32 %v370, 0.01
    %v377 = vmul.f32 %v373, 0.01
    %v378 = vmax.f32 %v370, %v376
    %v379 = vmax.f32 %v373, %v377
    %v380 = vpack.c.bf16 %v379, %v378
    %v382 = vlaneseq
    %v383 = vshrl.u32 %v382, 7
    %v384 = vsub.s32 0, %v383
    %v385 = vrot.slane %v137, %v384
    %v403 = vunpack.c.l.b16 %v121
    %v404 = vunpack.c.l.b16 %v122
    %v405 = vunpack.c.l.b16 %v123
    %v406 = vunpack.c.l.b16 %v124
    %v407 = vunpack.c.l.b16 %v125
    %v408 = vunpack.c.l.b16 %v126
    %v409 = vunpack.c.l.b16 %v127
    %v410 = vunpack.c.l.b16 %v128
    %v411 = vunpack.c.l.b16 %v129
    %v412 = vunpack.c.l.b16 %v130
    %v413 = vunpack.c.l.b16 %v131
    %v414 = vunpack.c.l.b16 %v132
    %v415 = vunpack.c.l.b16 %v133
    %v416 = vunpack.c.l.b16 %v134
    %v417 = vunpack.c.l.b16 %v135
    %v418 = vunpack.c.l.b16 %v136
    %v419 = vpack.c.b16 %v404, %v403
    %v420 = vpack.c.b16 %v406, %v405
    %v421 = vpack.c.b16 %v408, %v407
    %v422 = vpack.c.b16 %v410, %v409
    %v423 = vpack.c.b16 %v412, %v411
    %v424 = vpack.c.b16 %v414, %v413
    %v425 = vpack.c.b16 %v416, %v415
    %v426 = vpack.c.b16 %v418, %v417
    %435 = vmatprep.subr.bf16.mxu0 0
    %436 = vmatpush1.bf16.msra.mxu0 %v426
    %437 = vmatprep.subr.bf16.mxu0 0
    %438 = vmatpush1.bf16.msra.mxu0 %v425
    %439 = vmatprep.subr.bf16.mxu0 0
    %440 = vmatpush1.bf16.msra.mxu0 %v424
    %441 = vmatprep.subr.bf16.mxu0 0
    %442 = vmatpush1.bf16.msra.mxu0 %v423
    %443 = vmatprep.subr.bf16.mxu0 0
    %444 = vmatpush1.bf16.msra.mxu0 %v422
    %445 = vmatprep.subr.bf16.mxu0 0
    %446 = vmatpush1.bf16.msra.mxu0 %v421
    %447 = vmatprep.subr.bf16.mxu0 0
    %448 = vmatpush1.bf16.msra.mxu0 %v420
    %449 = vmatprep.subr.bf16.mxu0 0
    %450 = vmatpush1.bf16.msra.mxu0 %v419
    %451 = vmatprep.subr.bf16.mxu0 0
    %452 = vmatpush2.bf16.msra.mxu0 0
    %453 = vmatprep.subr.bf16.mxu0 0
    %454 = vmatpush2.bf16.msra.mxu0 0
    %455 = vmatprep.subr.bf16.mxu0 0
    %456 = vmatpush2.bf16.msra.mxu0 0
    %457 = vmatprep.subr.bf16.mxu0 0
    %458 = vmatpush2.bf16.msra.mxu0 0
    %459 = vmatprep.subr.bf16.mxu0 0
    %460 = vmatpush2.bf16.msra.mxu0 0
    %461 = vmatprep.subr.bf16.mxu0 0
    %462 = vmatpush2.bf16.msra.mxu0 0
    %463 = vmatprep.subr.bf16.mxu0 0
    %464 = vmatpush2.bf16.msra.mxu0 0
    %465 = vmatprep.subr.bf16.mxu0 0
    %466 = vmatpush2.bf16.msra.mxu0 0
    %467 = vmatprep.mubr.bf16.mxu0 0
    %468 = vmatmul.mubr.bf16.gmra.mxu0 %v380
    %v469 = vpop.f32.mrf.mxu0
    %v470 = vadd.f32 %v385, %v469
    %v471 = vpop.f32.mrf.mxu0
    %v472 = vpop.f32.mrf.mxu0
    %v473 = vadd.f32 %v385, %v472
    %v474 = vpop.f32.mrf.mxu0
    %475 = vdwg.mxu0
    %v476 = vtanh.pop %v470
    %v477 = vtanh.pop %v473
    %v478 = vpack.c.bf16 %v477, %v476
    %v480 = vunpack.c.l.b16 %v478
    %v481 = vunpack.c.h.b16 %v478
    %v482 = vpack.c.b16 %v480, %v480
    %v483 = vpack.c.b16 %v481, %v481
    %486 = vst [vmem:[#allocation10] sm:$0xf] %v482
    %487 = vst [vmem:[#allocation10 + $0x4] sm:$0xf] %v483
    // Predicated region
    $region46: #{tpu_custom_call.1} parent=1 // pred_check
      _
    $region47: #{tpu_custom_call.1} parent=1 // pred_check_branch
      %489 = sbr.rel (0) target = $region49
    $region48: #{tpu_custom_call.1} parent=1 // pred_region
      %s491 = ssub.s32 128, 128
      %492 = vsyncadd [#allocation4], %s491
      %s493 = sshll.u32 [#allocation10], 4
      %s494 = int_to_ptr.vmem [resolvable:$true] %s493
      %499 = dma.vmem_to_hbm [thread:$0]  %s494, 128, %s7, [#allocation4], 64, 64, 4
    $region49: #{tpu_custom_call.1} parent=1 // pred_fallthru
      _
    // Predicated region
    $region50: #{tpu_custom_call.1} parent=1 // pred_check
      _
    $region51: #{tpu_custom_call.1} parent=1 // pred_check_branch
      %501 = sbr.rel (0) target = $region53
    $region52: #{tpu_custom_call.1} parent=1 // pred_region
      %502 = dma.done [#allocation4], 128
    $region53: #{tpu_custom_call.1} parent=1 // pred_fallthru
      _
    %503 = vsyncpa [#allocation3], 1
    %504 = vsyncpa [#allocation6], 1
    %505 = vsyncpa [#allocation9], 1
    %506 = vsyncpa [#allocation4], 1

</llo_original>
